<compile_context>
chip_gen: v5e
topology: v5e:2x2
jax: 0.10.0
libtpu: 0.0.40
codegen_flags: <defaults>
</compile_context>

<pallas_src>
import jax
import jax.numpy as jnp
from jax.experimental import pallas as pl
from jax.experimental.pallas import tpu as pltpu


def freqp_kernel(c_ref, his_ref, soft_ref, v_ref, out_ref):
    his = his_ref[...]                                              # (TM, N) f32
    # folded gate: sigmoid(his @ v + c) as broadcast-mul + lane reduction
    logit = jnp.sum(his * v_ref[...], axis=-1, keepdims=True) + c_ref[0, 0]  # (TM, 1)
    gate = jax.nn.sigmoid(logit)                                    # (TM, 1)
    # res = gate * his + (1 - gate) * softmax(global_freq)
    out_ref[...] = gate * his + (1.0 - gate) * soft_ref[...]


def freqp_forward(his, gf, w_his, b_his, w_g, b_g, w_gate_his, w_gate_g, b_gate,
                  block_rows=512):
    """his: (B, N). Weights pre-transposed: w_his/w_g are (N, D); gate weights (1, D)."""
    B, N = his.shape

    # ---- batch-invariant precompute (tiny, parameter-only ops; done once) ----
    soft = jax.nn.softmax(gf, axis=-1).astype(jnp.float32)          # (1, N)
    v = (w_his @ w_gate_his.T).reshape(1, N).astype(jnp.float32)    # (1, N)  gate fold
    c = (b_his @ w_gate_his.T
         + (gf @ w_g + b_g) @ w_gate_g.T
         + b_gate).astype(jnp.float32)                              # (1, 1)

    # ---- batch tiling (lane-dense: never split the item axis) ----
    tm = min(block_rows, B)
    if tm < B:
        tm = max(8, (tm // 8) * 8)        # satisfy the (8,128) sublane constraint
    pad = (-B) % tm
    his_p = jnp.pad(his, ((0, pad), (0, 0))) if pad else his
    bp = B + pad
    grid = (bp // tm,)

    out = pl.pallas_call(
        freqp_kernel,
        out_shape=jax.ShapeDtypeStruct((bp, N), jnp.float32),
        grid_spec=pltpu.PrefetchScalarGridSpec(
            num_scalar_prefetch=0,
            grid=grid,
            in_specs=[
                # folded gate constant -> SMEM scalar
                pl.BlockSpec((1, 1), lambda i: (0, 0),
                             memory_space=pltpu.MemorySpace.SMEM),
                # his: tiled over batch, full lane-dense item axis
                pl.BlockSpec((tm, N), lambda i: (i, 0)),
                # softmax(global_freq): small, resident every step
                pl.BlockSpec((1, N), lambda i: (0, 0)),
                # folded gate vector v
                pl.BlockSpec((1, N), lambda i: (0, 0)),
            ],
            out_specs=pl.BlockSpec((tm, N), lambda i: (i, 0)),
        ),
        compiler_params=pltpu.CompilerParams(
            dimension_semantics=("parallel",)),
    )(c, his_p, soft, v)

    return out[:B] if pad else out


def freqp_reference(his, gf, w_his, b_his, w_g, b_g, w_gate_his, w_gate_g, b_gate):
    soft = jax.nn.softmax(gf, axis=-1)                               # (1, N)
    embds_his = his @ w_his + b_his                                  # (B, D)
    embds_g = gf @ w_g + b_g                                         # (1, D)
    gate = jax.nn.sigmoid(
        jnp.sum(embds_his * w_gate_his, axis=-1, keepdims=True)
        + jnp.sum(embds_g * w_gate_g, axis=-1, keepdims=True)
        + b_gate)                                                    # (B, 1)
    return gate * his + (1.0 - gate) * soft.reshape(-1)


if __name__ == "__main__":
    num_items = 128   # numItems
    dim = 32          # config.dim
    batch = 24

    key = jax.random.PRNGKey(0)
    ks = jax.random.split(key, 8)

    # deterministic synthetic parameters (shapes from the module's __init__)
    gf = jax.random.normal(ks[0], (1, num_items), jnp.float32) * 0.1        # Embedding(1, numItems)
    w_his = jax.random.normal(ks[1], (num_items, dim), jnp.float32) * 0.05  # Linear(numItems, dim).weight^T
    b_his = jax.random.normal(ks[2], (1, dim), jnp.float32) * 0.05
    w_g = jax.random.normal(ks[3], (num_items, dim), jnp.float32) * 0.05    # Linear(numItems, dim).weight^T
    b_g = jax.random.normal(ks[4], (1, dim), jnp.float32) * 0.05
    w_gate_his = jax.random.normal(ks[5], (1, dim), jnp.float32) * 0.1      # Linear(dim, 1).weight
    w_gate_g = jax.random.normal(ks[6], (1, dim), jnp.float32) * 0.1        # Linear(dim, 1).weight
    # combined bias of gate_his and gate_global (they always add together)
    b_gate = jnp.full((1, 1), 0.01, jnp.float32)

    his = jax.random.uniform(ks[7], (batch, num_items), jnp.float32)

    # block_rows=8 so the small demo still exercises the batch grid (3 tiles)
    out = freqp_forward(his, gf, w_his, b_his, w_g, b_g,
                        w_gate_his, w_gate_g, b_gate, block_rows=8)
    out = jax.block_until_ready(out)

    ref = freqp_reference(his, gf, w_his, b_his, w_g, b_g,
                          w_gate_his, w_gate_g, b_gate)
    assert out.shape == (batch, num_items)
    assert jnp.allclose(out, ref, atol=2e-5, rtol=2e-5), "mismatch vs reference"

    print("KERNEL_OK")
</pallas_src>

<mosaic_0001>
module attributes {stable_mosaic.version = 11 : i64} {
  func.func @freqp_kernel(%arg0: i32, %arg1: memref<1x1xf32, #tpu.memory_space<smem>>, %arg2: memref<8x128xf32, #tpu.memory_space<vmem>>, %arg3: memref<1x128xf32, #tpu.memory_space<vmem>>, %arg4: memref<1x128xf32, #tpu.memory_space<vmem>>, %arg5: memref<8x128xf32, #tpu.memory_space<vmem>>) attributes {dimension_semantics = [#tpu.dimension_semantics<parallel>], iteration_bounds = array<i64: 3>, scalar_prefetch = 0 : i64, scratch_operands = 0 : i64, tpu.core_type = #tpu.core_type<tc>, window_params = [{transform_indices = @transform_0, window_bounds = array<i64: 1, 1>}, {transform_indices = @transform_1, window_bounds = array<i64: 8, 128>}, {pipeline_mode = #tpu.pipeline_mode<synchronous>, transform_indices = @transform_2, window_bounds = array<i64: 1, 128>}, {pipeline_mode = #tpu.pipeline_mode<synchronous>, transform_indices = @transform_3, window_bounds = array<i64: 1, 128>}, {transform_indices = @transform_4, window_bounds = array<i64: 8, 128>}]} {
    %c0 = arith.constant 0 : index
    %c0_0 = arith.constant 0 : index
    %0 = vector.load %arg2[%c0, %c0_0] : memref<8x128xf32, #tpu.memory_space<vmem>>, vector<8x128xf32>
    %c0_1 = arith.constant 0 : index
    %c0_2 = arith.constant 0 : index
    %1 = vector.load %arg4[%c0_1, %c0_2] : memref<1x128xf32, #tpu.memory_space<vmem>>, vector<1x128xf32>
    %2 = vector.broadcast %1 : vector<1x128xf32> to vector<8x128xf32>
    %3 = arith.mulf %0, %2 : vector<8x128xf32>
    %cst = arith.constant dense<0.000000e+00> : vector<8xf32>
    %4 = vector.multi_reduction <add>, %3, %cst [1] : vector<8x128xf32> to vector<8xf32>
    %5 = vector.shape_cast %4 : vector<8xf32> to vector<8x1xf32>
    %c0_3 = arith.constant 0 : index
    %c0_4 = arith.constant 0 : index
    %6 = memref.load %arg1[%c0_3, %c0_4] : memref<1x1xf32, #tpu.memory_space<smem>>
    %7 = vector.broadcast %6 : f32 to vector<8x1xf32>
    %8 = arith.addf %5, %7 : vector<8x1xf32>
    %9 = arith.negf %8 : vector<8x1xf32>
    %10 = math.exp %9 : vector<8x1xf32>
    %cst_5 = arith.constant 1.000000e+00 : f32
    %11 = vector.broadcast %cst_5 : f32 to vector<8x1xf32>
    %12 = arith.addf %11, %10 : vector<8x1xf32>
    %13 = arith.divf %11, %12 : vector<8x1xf32>
    %14 = vector.broadcast %13 : vector<8x1xf32> to vector<8x128xf32>
    %15 = arith.mulf %14, %0 : vector<8x128xf32>
    %cst_6 = arith.constant 1.000000e+00 : f32
    %16 = vector.broadcast %cst_6 : f32 to vector<8x1xf32>
    %17 = arith.subf %16, %13 : vector<8x1xf32>
    %c0_7 = arith.constant 0 : index
    %c0_8 = arith.constant 0 : index
    %18 = vector.load %arg3[%c0_7, %c0_8] : memref<1x128xf32, #tpu.memory_space<vmem>>, vector<1x128xf32>
    %19 = vector.broadcast %17 : vector<8x1xf32> to vector<8x128xf32>
    %20 = vector.broadcast %18 : vector<1x128xf32> to vector<8x128xf32>
    %21 = arith.mulf %19, %20 : vector<8x128xf32>
    %22 = arith.addf %15, %21 : vector<8x128xf32>
    %c0_9 = arith.constant 0 : index
    %c0_10 = arith.constant 0 : index
    %23 = vector.load %arg5[%c0_9, %c0_10] : memref<8x128xf32, #tpu.memory_space<vmem>>, vector<8x128xf32>
    tpu.vector_store %arg5[%c0_9, %c0_10], %22 {strides = array<i32>} : memref<8x128xf32, #tpu.memory_space<vmem>>, vector<8x128xf32>,
    return
  }
  func.func @transform_0(%arg0: i32) -> (i32, i32) {
    %c0_i32 = arith.constant 0 : i32
    %c0_i32_0 = arith.constant 0 : i32
    %c0_i32_1 = arith.constant 0 : i32
    return %c0_i32, %c0_i32_0 : i32, i32
  }
  func.func @transform_1(%arg0: i32) -> (i32, i32) {
    %c0_i32 = arith.constant 0 : i32
    %c0_i32_0 = arith.constant 0 : i32
    return %arg0, %c0_i32 : i32, i32
  }
  func.func @transform_2(%arg0: i32) -> (i32, i32) {
    %c0_i32 = arith.constant 0 : i32
    %c0_i32_0 = arith.constant 0 : i32
    %c0_i32_1 = arith.constant 0 : i32
    return %c0_i32, %c0_i32_0 : i32, i32
  }
  func.func @transform_3(%arg0: i32) -> (i32, i32) {
    %c0_i32 = arith.constant 0 : i32
    %c0_i32_0 = arith.constant 0 : i32
    %c0_i32_1 = arith.constant 0 : i32
    return %c0_i32, %c0_i32_0 : i32, i32
  }
  func.func @transform_4(%arg0: i32) -> (i32, i32) {
    %c0_i32 = arith.constant 0 : i32
    %c0_i32_0 = arith.constant 0 : i32
    return %arg0, %c0_i32 : i32, i32
  }
}

</mosaic_0001>

<llo_original>
// kernel: tpu_custom_call.1
$region0: #{tpu_custom_call.1}
  #allocation0 [shape = 'u32[]', space=smem, size = 0x4, offset = 0x4, fixed_abs, tag = 'smem constant byte address 0x4 - core index']
  #allocation1 [shape = 'u32[72,128]{1,0:T(1,128)}', space=vmem, size = 0x9000, scoped, tag = 'internal scratch']
  #allocation2 [shape = 'f32[1,1]{1,0:T(1,128)S(6)}', space=smem, size = 0x200, scoped, tag = 'scoped memory for tpu_custom_call.1']
  %s0 = inlined_call_operand.<no memory space> [shape: f32[1,1], index: 0, kind: input, shape index: {}]
  %s1 = inlined_call_operand.hbm [shape: f32[24,128], index: 1, kind: input, shape index: {}]
  %s2 = inlined_call_operand.vmem [shape: f32[1,128], index: 2, kind: input, shape index: {}]
  %s3 = inlined_call_operand.vmem [shape: f32[1,128], index: 3, kind: input, shape index: {}]
  %s4 = inlined_call_operand.hbm [shape: f32[24,128], index: 4, kind: output, shape index: {}]
  %s5 = sld [smem:[#allocation0]]
  $region53: #{tpu_custom_call.1} parent=0
    _
  %s7 = ssub.s32 1, %s5
  %s8 = scalar_select 0, %s7, %s5
  %9 = sst [smem:[#allocation2]] %s0
  $region1: #{tpu_custom_call.1} parent=0
    #allocation3 [shape = 'u8[8192]{0}', space=vmem, size = 0x2000, scoped, tag = 'input window, operand 1']
    #allocation4 [shape = 's32[2]{0}', space=sflag, size = 0x8, scoped, tag = 'scoped memory for tpu_custom_call.1']
    #allocation5 [shape = 's32[2]{0}', space=sflag, size = 0x8, scoped, tag = 'scoped memory for tpu_custom_call.1']
    #allocation6 [shape = 'u8[8192]{0}', space=vmem, size = 0x2000, scoped, tag = 'output window, operand 0']
    %10 = vsyncpa [#allocation4], 0
    %s11 = scalar_lea.sflag [#allocation4], 1
    %12 = vsyncpa %s11, 0
    %13 = vsyncpa [#allocation5], 0
    %s14 = scalar_lea.sflag [#allocation5], 1
    %15 = vsyncpa %s14, 0
    loop: start=0, step=1, limit=5
    $region2: #{tpu_custom_call.1} parent=1 // loop_pre_header
      _
    $region3: #{tpu_custom_call.1} parent=1 // loop_header
      %s17 = sphi 0, %s21
      %p18 = scmp.ge.s32.totalorder %s17, 5
      %s25 = sphi 0, %s25
      %s27 = sphi 0, %s25
      %s28 = sphi 0, %s27
      %s42 = sphi 0, %s28
      %s48 = sphi 0, %s50
      %s51 = sphi 0, %s48
      %s52 = sphi 0, %s51
      %s68 = sphi 0, %s52
      %s72 = sphi 0, %s72
      %s74 = sphi 0, %s72
      %s75 = sphi 0, %s74
      %s89 = sphi 0, %s75
      %s93 = sphi 0, %s93
      %s95 = sphi 0, %s93
      %s96 = sphi 0, %s95
      %s110 = sphi 0, %s96
      %s116 = sphi 0, %s118
      %s119 = sphi 0, %s116
      %s120 = sphi 0, %s119
      %s136 = sphi 0, %s120
    $region4: #{tpu_custom_call.1} parent=1 // loop_header_branch
      %20 = sbr.rel (%p18) target = $region8
    $region5: #{tpu_custom_call.1} parent=1 // loop_body
      %s22 = ssub.s32 %s17, 1
      %s23 = ssub.s32 %s17, 2
      %s24 = sadd.s32 %s17, 1
      %s26 = sadd.s32 %s25, 1
      %p29 = scmp.eq.s32.totalorder %s17, 2
      %p30 = scmp.ne.s32.totalorder %s25, %s27
      %p31 = scmp.eq.s32.totalorder %s17, 0
      %p32 = por %p30, %p31
      %p33 = scmp.ne.s32.totalorder %s25, %s27
      %p34 = scmp.eq.s32.totalorder %s22, 2
      %p35 = por %p33, %p34
      %p36 = scmp.ne.s32.totalorder %s27, %s28
      %p37 = scmp.eq.s32.totalorder %s22, 0
      %p38 = por %p36, %p37
      %p39 = scmp.ne.s32.totalorder %s27, %s28
      %p40 = scmp.eq.s32.totalorder %s23, 2
      %p41 = por %p39, %p40
      %p43 = scmp.ne.s32.totalorder %s28, %s42
      %p44 = scmp.eq.s32.totalorder %s23, 0
      %p45 = por %p43, %p44
      %s46 = ssub.s32 %s17, %s24
      %p47 = scmp.eq.s32.totalorder %s46, 0
      %s49 = sadd.s32 %s48, 1
      %s50 = scalar_select %p47, %s48, %s49
      %p53 = pneg %p47
      %p54 = scmp.eq.s32.totalorder %s17, 2
      %p55 = por %p53, %p54
      %p56 = scmp.ne.s32.totalorder %s48, %s51
      %p57 = scmp.eq.s32.totalorder %s17, 0
      %p58 = por %p56, %p57
      %p59 = scmp.ne.s32.totalorder %s48, %s51
      %p60 = scmp.eq.s32.totalorder %s22, 2
      %p61 = por %p59, %p60
      %p62 = scmp.ne.s32.totalorder %s51, %s52
      %p63 = scmp.eq.s32.totalorder %s22, 0
      %p64 = por %p62, %p63
      %p65 = scmp.ne.s32.totalorder %s51, %s52
      %p66 = scmp.eq.s32.totalorder %s23, 2
      %p67 = por %p65, %p66
      %p69 = scmp.ne.s32.totalorder %s52, %s68
      %p70 = scmp.eq.s32.totalorder %s23, 0
      %p71 = por %p69, %p70
      %s73 = sadd.s32 %s72, 1
      %p76 = scmp.eq.s32.totalorder %s17, 2
      %p77 = scmp.ne.s32.totalorder %s72, %s74
      %p78 = scmp.eq.s32.totalorder %s17, 0
      %p79 = por %p77, %p78
      %p80 = scmp.ne.s32.totalorder %s72, %s74
      %p81 = scmp.eq.s32.totalorder %s22, 2
      %p82 = por %p80, %p81
      %p83 = scmp.ne.s32.totalorder %s74, %s75
      %p84 = scmp.eq.s32.totalorder %s22, 0
      %p85 = por %p83, %p84
      %p86 = scmp.ne.s32.totalorder %s74, %s75
      %p87 = scmp.eq.s32.totalorder %s23, 2
      %p88 = por %p86, %p87
      %p90 = scmp.ne.s32.totalorder %s75, %s89
      %p91 = scmp.eq.s32.totalorder %s23, 0
      %p92 = por %p90, %p91
      %s94 = sadd.s32 %s93, 1
      %p97 = scmp.eq.s32.totalorder %s17, 2
      %p98 = scmp.ne.s32.totalorder %s93, %s95
      %p99 = scmp.eq.s32.totalorder %s17, 0
      %p100 = por %p98, %p99
      %p101 = scmp.ne.s32.totalorder %s93, %s95
      %p102 = scmp.eq.s32.totalorder %s22, 2
      %p103 = por %p101, %p102
      %p104 = scmp.ne.s32.totalorder %s95, %s96
      %p105 = scmp.eq.s32.totalorder %s22, 0
      %p106 = por %p104, %p105
      %p107 = scmp.ne.s32.totalorder %s95, %s96
      %p108 = scmp.eq.s32.totalorder %s23, 2
      %p109 = por %p107, %p108
      %p111 = scmp.ne.s32.totalorder %s96, %s110
      %p112 = scmp.eq.s32.totalorder %s23, 0
      %p113 = por %p111, %p112
      %s114 = ssub.s32 %s17, %s24
      %p115 = scmp.eq.s32.totalorder %s114, 0
      %s117 = sadd.s32 %s116, 1
      %s118 = scalar_select %p115, %s116, %s117
      %p121 = pneg %p115
      %p122 = scmp.eq.s32.totalorder %s17, 2
      %p123 = por %p121, %p122
      %p124 = scmp.ne.s32.totalorder %s116, %s119
      %p125 = scmp.eq.s32.totalorder %s17, 0
      %p126 = por %p124, %p125
      %p127 = scmp.ne.s32.totalorder %s116, %s119
      %p128 = scmp.eq.s32.totalorder %s22, 2
      %p129 = por %p127, %p128
      %p130 = scmp.ne.s32.totalorder %s119, %s120
      %p131 = scmp.eq.s32.totalorder %s22, 0
      %p132 = por %p130, %p131
      %p133 = scmp.ne.s32.totalorder %s119, %s120
      %p134 = scmp.eq.s32.totalorder %s23, 2
      %p135 = por %p133, %p134
      %p137 = scmp.ne.s32.totalorder %s120, %s136
      %p138 = scmp.eq.s32.totalorder %s23, 0
      %p139 = por %p137, %p138
      %p140 = scmp.le.s32.totalorder 1, %s17
      %p141 = scmp.lt.s32.totalorder %s17, 4
      %p142 = pnand %p140, %p141
      %p143 = pneg %p142
      // Predicated region
      $region9: #{tpu_custom_call.1} parent=5 // pred_check
        _
      $region10: #{tpu_custom_call.1} parent=5 // pred_check_branch
        %145 = sbr.rel (%p142) target = $region12
      $region11: #{tpu_custom_call.1} parent=5 // pred_region
        %s146 = ssub.s32 %s17, 1
        // Predicated region
        $region13: #{tpu_custom_call.1} parent=11 // pred_check
          %p147 = pneg %p38
        $region14: #{tpu_custom_call.1} parent=11 // pred_check_branch
          %149 = sbr.rel (%p147) target = $region16
        $region15: #{tpu_custom_call.1} parent=11 // pred_region
          _
        $region16: #{tpu_custom_call.1} parent=11 // pred_fallthru
          _
        // Predicated region
        $region17: #{tpu_custom_call.1} parent=11 // pred_check
          %p150 = pneg %p85
        $region18: #{tpu_custom_call.1} parent=11 // pred_check_branch
          %152 = sbr.rel (%p150) target = $region20
        $region19: #{tpu_custom_call.1} parent=11 // pred_region
          _
        $region20: #{tpu_custom_call.1} parent=11 // pred_fallthru
          _
        // Predicated region
        $region21: #{tpu_custom_call.1} parent=11 // pred_check
          %p153 = pneg %p106
        $region22: #{tpu_custom_call.1} parent=11 // pred_check_branch
          %155 = sbr.rel (%p153) target = $region24
        $region23: #{tpu_custom_call.1} parent=11 // pred_region
          _
        $region24: #{tpu_custom_call.1} parent=11 // pred_fallthru
          _
      $region12: #{tpu_custom_call.1} parent=5 // pred_fallthru
        _
      %p156 = scmp.lt.s32.totalorder %s17, 3
      // Predicated region
      $region25: #{tpu_custom_call.1} parent=5 // pred_check
        %p157 = pneg %p156
      $region26: #{tpu_custom_call.1} parent=5 // pred_check_branch
        %159 = sbr.rel (%p157) target = $region28
      $region27: #{tpu_custom_call.1} parent=5 // pred_region
        // Predicated region
        $region29: #{tpu_custom_call.1} parent=27 // pred_check
          %p160 = pneg %p58
        $region30: #{tpu_custom_call.1} parent=27 // pred_check_branch
          %162 = sbr.rel (%p160) target = $region32
        $region31: #{tpu_custom_call.1} parent=27 // pred_region
          %s163 = sand.u32 %s48, 1
          %s164 = scalar_lea.sflag [#allocation4], %s163
          %s165 = sand.u32 %s48, 1
          %s166 = smul.addr %s165, 8
          %s167 = scalar_lea.vmem [#allocation3], %s166
          %169 = vsyncadd %s164, 0
          %s170 = smul.addr %s17, 8
          %s171 = scalar_lea.hbm %s1, %s170
          %s173 = sshll.u32 %s171, 4
          %s174 = int_to_ptr.hbm [resolvable:$true] %s173
          %s175 = sshll.u32 %s167, 4
          %s176 = int_to_ptr.vmem [resolvable:$true] %s175
          %178 = dma.hbm_to_vmem [thread:$0]  %s174, 128, %s176, %s164
        $region32: #{tpu_custom_call.1} parent=27 // pred_fallthru
          _
      $region28: #{tpu_custom_call.1} parent=5 // pred_fallthru
        _
      %p179 = scmp.le.s32.totalorder 1, %s17
      %p180 = scmp.lt.s32.totalorder %s17, 4
      %p181 = pnand %p179, %p180
      %p182 = pneg %p181
      // Predicated region
      $region33: #{tpu_custom_call.1} parent=5 // pred_check
        _
      $region34: #{tpu_custom_call.1} parent=5 // pred_check_branch
        %184 = sbr.rel (%p181) target = $region36
      $region35: #{tpu_custom_call.1} parent=5 // pred_region
        %s185 = ssub.s32 %s17, 1
        %s186 = sand.u32 %s51, 1
        %s187 = scalar_lea.sflag [#allocation4], %s186
        %s188 = sand.u32 %s51, 1
        %s189 = smul.addr %s188, 8
        %s190 = scalar_lea.vmem [#allocation3], %s189
        // Predicated region
        $region37: #{tpu_custom_call.1} parent=35 // pred_check
          %p191 = pneg %p64
        $region38: #{tpu_custom_call.1} parent=35 // pred_check_branch
          %193 = sbr.rel (%p191) target = $region40
        $region39: #{tpu_custom_call.1} parent=35 // pred_region
          %195 = dma.done %s187, 128
        $region40: #{tpu_custom_call.1} parent=35 // pred_fallthru
          _
        %p196 = pneg %p38
        %p197 = pneg %p35
        %s198 = sand.u32 %s51, 1
        %s199 = scalar_lea.sflag [#allocation4], %s198
        %s200 = sand.u32 %s51, 1
        %s201 = smul.addr %s200, 8
        %s202 = scalar_lea.vmem [#allocation3], %s201
        %p203 = pneg %p64
        %p204 = pneg %p61
        %p205 = pneg %p85
        %p206 = pneg %p82
        %p207 = pneg %p106
        %p208 = pneg %p103
        %p209 = pneg %p132
        %p210 = pneg %p129
        %s211 = sand.u32 %s119, 1
        %s212 = scalar_lea.sflag [#allocation5], %s211
        %s213 = sand.u32 %s119, 1
        %s214 = smul.addr %s213, 8
        %s215 = scalar_lea.vmem [#allocation6], %s214
        %v216 = vld [vmem:[%s190] sm:$0xff]
        %v217 = vld [vmem:[%s3] sm:$0x1]
        %v219 = vperm.slane %v217, 0
        %v221 = vmul.f32 %v216, %v219
        %222 = vadd.xlane.f32.xlu0 %v221
        %v223 = vpop.xlane.xlu0 %222
        %s224 = sld [smem:[#allocation2]]
        %v225 = vstv %s224
        %v226 = vadd.f32 %v223, %v225
        %v227 = vxor.u32 %v226, 2147483648
        %v228 = vmul.f32 %v227, 1.442695
        %v229 = vpow.pop %v228
        %v230 = vadd.f32 %v229, 1.0
        %v231 = vrcp.pop %v230
        %v232 = vmul.f32 %v230, %v231
        %v233 = vsub.f32 1.0, %v232
        %v234 = vmul.f32 %v231, %v233
        %v235 = vadd.f32 %v231, %v234
        %vm236 = vweird.f32 %v230
        %vm237 = vweird.f32 %v231
        %vm238 = vmor %vm236, %vm237
        %v239 = vsel %vm238, %v231, %v235
        %v240 = vand.u32 2147483647, %v230
        %vm241 = vcmp.eq.f32.partialorder %v240, 8.507059e+37
        %v242 = vand.u32 %v230, 2147483648
        %v243 = vor.u32 1.1754944e-38, %v242
        %v244 = vsel %vm241, %v243, %v239
        %v245 = vmul.f32 1.0, %v244
        %v246 = vmul.f32 %v245, %v216
        %v247 = vsub.f32 1.0, %v245
        %v248 = vld [vmem:[%s2] sm:$0x1]
        %v250 = vperm.slane %v248, 0
        %v252 = vmul.f32 %v247, %v250
        %v253 = vadd.f32 %v246, %v252
        %254 = vst [vmem:[%s215] sm:$0xff] %v253
        %s255 = sand.u32 %s119, 1
        %s256 = scalar_lea.sflag [#allocation5], %s255
        %s257 = sand.u32 %s119, 1
        %s258 = smul.addr %s257, 8
        %s259 = scalar_lea.vmem [#allocation6], %s258
        // Predicated region
        $region41: #{tpu_custom_call.1} parent=35 // pred_check
          %p260 = pneg %p129
        $region42: #{tpu_custom_call.1} parent=35 // pred_check_branch
          %262 = sbr.rel (%p260) target = $region44
        $region43: #{tpu_custom_call.1} parent=35 // pred_region
          %264 = vsyncadd %s256, 0
          %s265 = smul.addr %s22, 8
          %s266 = scalar_lea.hbm %s4, %s265
          %s268 = sshll.u32 %s259, 4
          %s269 = int_to_ptr.vmem [resolvable:$true] %s268
          %s270 = sshll.u32 %s266, 4
          %s271 = int_to_ptr.hbm [resolvable:$true] %s270
          %273 = dma.vmem_to_hbm [thread:$0]  %s269, 128, %s271, %s256
        $region44: #{tpu_custom_call.1} parent=35 // pred_fallthru
          _
      $region36: #{tpu_custom_call.1} parent=5 // pred_fallthru
        _
      %p274 = scmp.le.s32.totalorder 2, %s17
      // Predicated region
      $region45: #{tpu_custom_call.1} parent=5 // pred_check
        %p275 = pneg %p274
      $region46: #{tpu_custom_call.1} parent=5 // pred_check_branch
        %277 = sbr.rel (%p275) target = $region48
      $region47: #{tpu_custom_call.1} parent=5 // pred_region
        %s278 = ssub.s32 %s17, 2
        // Predicated region
        $region49: #{tpu_custom_call.1} parent=47 // pred_check
          %p279 = pneg %p135
        $region50: #{tpu_custom_call.1} parent=47 // pred_check_branch
          %281 = sbr.rel (%p279) target = $region52
        $region51: #{tpu_custom_call.1} parent=47 // pred_region
          %s282 = sand.u32 %s120, 1
          %s283 = scalar_lea.sflag [#allocation5], %s282
          %s284 = sand.u32 %s120, 1
          %s285 = smul.addr %s284, 8
          %s286 = scalar_lea.vmem [#allocation6], %s285
          %288 = dma.done %s283, 128
        $region52: #{tpu_custom_call.1} parent=47 // pred_fallthru
          _
      $region48: #{tpu_custom_call.1} parent=5 // pred_fallthru
        _
    $region6: #{tpu_custom_call.1} parent=1 // loop_footer
      %s21 = sadd.s32 1, %s17
    $region7: #{tpu_custom_call.1} parent=1 // loop_footer_branch
      %16 = sbr.rel target = $region3
    $region8: #{tpu_custom_call.1} parent=1 // loop_exit
      _
    %289 = vsyncpa [#allocation4], 1
    %s290 = scalar_lea.sflag [#allocation4], 1
    %291 = vsyncpa %s290, 1
    %292 = vsyncpa [#allocation5], 1
    %s293 = scalar_lea.sflag [#allocation5], 1
    %294 = vsyncpa %s293, 1

</llo_original>
